<compile_context>
chip_gen: v6e
topology: v6e:2x2x1
jax: 0.10.0
libtpu: 0.0.40
codegen_flags: <defaults>
</compile_context>

<pallas_src>
import functools

import jax
import jax.numpy as jnp
from jax.experimental import pallas as pl
from jax.experimental.pallas import tpu as pltpu

HIDDEN = 128      # fc1 width (nn.Linear(num_inputs, 128)); already lane-dense.


def _round_up(n, m):
    return ((n + m - 1) // m) * m


def _qnet_kernel(x_ref, w1_ref, b1_ref, w2_ref, b2_ref, out_ref):
    # x_ref : (tb, F)         f32 observations (F = num_inputs, full last dim)
    # w1_ref: (F, HIDDEN)     compute dtype (f32 or bf16)
    # b1_ref: (1, HIDDEN)     f32
    # w2_ref: (HIDDEN, OUT_W) compute dtype
    # b2_ref: (1, OUT_W)      f32
    # out_ref: (tb, OUT_W)    f32; real q-values live in the first
    #                         num_outputs lanes (sliced in the wrapper).
    x = x_ref[...].astype(w1_ref.dtype)
    # fc1 on the MXU; K = num_inputs is tiny so it is essentially free.
    # TODO(synk): on v5e a few VPU FMAs (x[:, k:k+1] * w1[k, :]) may beat the
    # lane-sparse MXU dot; only switch if the bundle shows fc1 on the path.
    h = jnp.dot(x, w1_ref[...], preferred_element_type=jnp.float32)
    h = jnp.maximum(h + b1_ref[...], 0.0)                 # f32 bias + ReLU (VPU)
    q = jnp.dot(h.astype(w2_ref.dtype), w2_ref[...],
                preferred_element_type=jnp.float32)       # (tb, OUT_W), MXU
    out_ref[...] = (q + b2_ref[...]).astype(out_ref.dtype)


def pack_qnet_params(w1, b1, w2, b2, compute_dtype=jnp.bfloat16):
    """Prepare QNet params for the kernel.

    w1: (num_inputs, HIDDEN), b1: (HIDDEN,) or (1, HIDDEN)
    w2: (HIDDEN, num_outputs), b2: (num_outputs,) or (1, num_outputs)
    (fan_in x fan_out layout, i.e. torch Linear weights transposed)

    Weights are cast to `compute_dtype` (bf16 by default: half the HBM->VMEM
    bytes, f32 MXU accumulation in the kernel); fc2 columns are zero-padded to
    a multiple of 8 lanes.  Biases stay f32 and are added on the VPU in the
    epilogue, so they never lose precision.
    """
    num_inputs, hidden = w1.shape
    hidden2, num_outputs = w2.shape
    assert hidden == HIDDEN and hidden2 == HIDDEN
    out_w = _round_up(num_outputs, 8)

    w1_p = w1.astype(compute_dtype)                                 # (F, 128)
    b1_p = jnp.reshape(b1, (1, HIDDEN)).astype(jnp.float32)
    w2_p = jnp.zeros((HIDDEN, out_w), jnp.float32)
    w2_p = w2_p.at[:, :num_outputs].set(w2.astype(jnp.float32))
    w2_p = w2_p.astype(compute_dtype)                               # (128, OUT_W)
    b2_p = jnp.zeros((1, out_w), jnp.float32)
    b2_p = b2_p.at[:, :num_outputs].set(
        jnp.reshape(b2, (num_outputs,)).astype(jnp.float32))
    return w1_p, b1_p, w2_p, b2_p


@functools.partial(jax.jit, static_argnames=("num_outputs", "block_b"))
def qnet_forward(x, w1_p, b1_p, w2_p, b2_p, *, num_outputs, block_b=2048):
    """q = fc2(relu(fc1(x))) for x of shape (B, num_inputs)."""
    B, num_inputs = x.shape
    out_w = w2_p.shape[1]
    x = x.astype(jnp.float32)

    # Batch tiling: multiples of 8 (f32 sublane; x and out stay f32 so the
    # bf16 (16,128) minimum never applies to a blocked dim).  Big tiles
    # amortize the ~0.35us/step overhead; for large batches force >= 2 tiles
    # so ("parallel",) can shard across v7x's two TensorCores.
    tb = min(block_b, _round_up(B, 8))
    if B >= 256 and _round_up(B, 8) <= tb:     # whole batch would be one tile
        tb = _round_up(-(-B // 2), 8)          # split into (at least) 2 tiles
    b_pad = _round_up(B, tb)
    if b_pad != B:
        # Padded rows compute bias-only garbage q; they are sliced off below
        # and must never be reduced over.
        x = jnp.pad(x, ((0, b_pad - B), (0, 0)))

    grid = (b_pad // tb,)
    w_itemsize = jnp.dtype(w1_p.dtype).itemsize
    flops = 2 * b_pad * HIDDEN * (num_inputs + out_w)
    bytes_accessed = (b_pad * num_inputs * 4
                      + (w1_p.size + w2_p.size) * w_itemsize
                      + (b1_p.size + b2_p.size) * 4
                      + b_pad * out_w * 4)

    q_pad = pl.pallas_call(
        _qnet_kernel,
        out_shape=jax.ShapeDtypeStruct((b_pad, out_w), jnp.float32),
        grid_spec=pltpu.PrefetchScalarGridSpec(
            num_scalar_prefetch=0,
            grid=grid,
            in_specs=[
                pl.BlockSpec((tb, num_inputs), lambda i: (i, 0)),
                pl.BlockSpec((num_inputs, HIDDEN), lambda i: (0, 0)),
                pl.BlockSpec((1, HIDDEN), lambda i: (0, 0)),
                pl.BlockSpec((HIDDEN, out_w), lambda i: (0, 0)),
                pl.BlockSpec((1, out_w), lambda i: (0, 0)),
            ],
            out_specs=pl.BlockSpec((tb, out_w), lambda i: (i, 0)),
        ),
        compiler_params=pltpu.CompilerParams(
            dimension_semantics=("parallel",)),
        cost_estimate=pl.CostEstimate(
            flops=flops, transcendentals=0, bytes_accessed=bytes_accessed),
    )(x, w1_p, b1_p, w2_p, b2_p)

    # Real q-values are the first num_outputs lanes of the first B rows.
    return q_pad[:B, :num_outputs]


def init_qnet_params(key, num_inputs, num_outputs, hidden=HIDDEN):
    """Xavier-uniform weights (matches nn.init.xavier_uniform) and torch's
    default Linear bias init uniform(-1/sqrt(fan_in), 1/sqrt(fan_in))."""
    k1, k2, k3, k4 = jax.random.split(key, 4)

    def xavier(k, fan_in, fan_out):
        limit = jnp.sqrt(6.0 / (fan_in + fan_out))
        # stored as (fan_in, fan_out) = torch weight transposed
        return jax.random.uniform(k, (fan_in, fan_out), jnp.float32,
                                  minval=-limit, maxval=limit)

    def bias(k, fan_in, fan_out):
        bound = 1.0 / jnp.sqrt(fan_in)
        return jax.random.uniform(k, (1, fan_out), jnp.float32,
                                  minval=-bound, maxval=bound)

    w1 = xavier(k1, num_inputs, hidden)
    b1 = bias(k2, num_inputs, hidden)
    w2 = xavier(k3, hidden, num_outputs)
    b2 = bias(k4, hidden, num_outputs)
    return w1, b1, w2, b2


def _reference(x, w1, b1, w2, b2):
    h = jnp.maximum(x @ w1 + b1, 0.0)
    return h @ w2 + b2


if __name__ == "__main__":
    # CartPole: 4 observations -> 2 actions.
    num_inputs, num_outputs = 4, 2

    key = jax.random.PRNGKey(0)
    kx, kp, kx2 = jax.random.split(key, 3)
    w1, b1, w2, b2 = init_qnet_params(kp, num_inputs, num_outputs)

    params_f32 = pack_qnet_params(w1, b1, w2, b2, compute_dtype=jnp.float32)
    params_bf16 = pack_qnet_params(w1, b1, w2, b2)   # bf16 matmul operands

    # act()-style small batch (single grid step, batch padded 8 -> 8).
    batch = 8
    x = jax.random.normal(kx, (batch, num_inputs), jnp.float32)
    q_ref = _reference(x, w1, b1, w2, b2)

    q32 = jax.block_until_ready(
        qnet_forward(x, *params_f32, num_outputs=num_outputs))
    assert q32.shape == (batch, num_outputs)
    assert jnp.allclose(q32, q_ref, atol=1e-5, rtol=1e-5)

    qbf = jax.block_until_ready(
        qnet_forward(x, *params_bf16, num_outputs=num_outputs))
    assert qbf.shape == (batch, num_outputs)
    assert jnp.allclose(qbf, q_ref, atol=5e-2, rtol=5e-2)

    # Replay-batch path: batch padding + multi-tile (>=2 steps) grid.
    batch2 = 300
    x2 = jax.random.normal(kx2, (batch2, num_inputs), jnp.float32)
    q2_ref = _reference(x2, w1, b1, w2, b2)

    q2 = jax.block_until_ready(
        qnet_forward(x2, *params_f32, num_outputs=num_outputs, block_b=128))
    assert q2.shape == (batch2, num_outputs)
    assert jnp.allclose(q2, q2_ref, atol=1e-5, rtol=1e-5)

    q2bf = jax.block_until_ready(
        qnet_forward(x2, *params_bf16, num_outputs=num_outputs))
    assert q2bf.shape == (batch2, num_outputs)
    assert jnp.allclose(q2bf, q2_ref, atol=5e-2, rtol=5e-2)

    print("KERNEL_OK")
</pallas_src>

<mosaic_0001>
module attributes {stable_mosaic.version = 11 : i64} {
  func.func @_qnet_kernel(%arg0: i32, %arg1: memref<8x4xf32, #tpu.memory_space<vmem>>, %arg2: memref<4x128xf32, #tpu.memory_space<vmem>>, %arg3: memref<1x128xf32, #tpu.memory_space<vmem>>, %arg4: memref<128x8xf32, #tpu.memory_space<vmem>>, %arg5: memref<1x8xf32, #tpu.memory_space<vmem>>, %arg6: memref<8x8xf32, #tpu.memory_space<vmem>>) attributes {dimension_semantics = [#tpu.dimension_semantics<parallel>], iteration_bounds = array<i64: 1>, scalar_prefetch = 0 : i64, scratch_operands = 0 : i64, tpu.core_type = #tpu.core_type<tc>, window_params = [{transform_indices = @transform_0, window_bounds = array<i64: 8, 4>}, {pipeline_mode = #tpu.pipeline_mode<synchronous>, transform_indices = @transform_1, window_bounds = array<i64: 4, 128>}, {pipeline_mode = #tpu.pipeline_mode<synchronous>, transform_indices = @transform_2, window_bounds = array<i64: 1, 128>}, {pipeline_mode = #tpu.pipeline_mode<synchronous>, transform_indices = @transform_3, window_bounds = array<i64: 128, 8>}, {pipeline_mode = #tpu.pipeline_mode<synchronous>, transform_indices = @transform_4, window_bounds = array<i64: 1, 8>}, {transform_indices = @transform_5, window_bounds = array<i64: 8, 8>}]} {
    %c0 = arith.constant 0 : index
    %c0_0 = arith.constant 0 : index
    %0 = vector.load %arg1[%c0, %c0_0] : memref<8x4xf32, #tpu.memory_space<vmem>>, vector<8x4xf32>
    %c0_1 = arith.constant 0 : index
    %c0_2 = arith.constant 0 : index
    %1 = vector.load %arg2[%c0_1, %c0_2] : memref<4x128xf32, #tpu.memory_space<vmem>>, vector<4x128xf32>
    %cst = arith.constant dense<0.000000e+00> : vector<8x128xf32>
    %2 = tpu.matmul %0, %1, %cst {dimension_numbers = #tpu.dot_dimension_numbers<[1], [0], [0], [1], [0, 0, 1, 1], [], []>} : vector<8x4xf32>, vector<4x128xf32>, vector<8x128xf32> -> vector<8x128xf32>
    %c0_3 = arith.constant 0 : index
    %c0_4 = arith.constant 0 : index
    %3 = vector.load %arg3[%c0_3, %c0_4] : memref<1x128xf32, #tpu.memory_space<vmem>>, vector<1x128xf32>
    %4 = vector.broadcast %3 : vector<1x128xf32> to vector<8x128xf32>
    %5 = arith.addf %2, %4 : vector<8x128xf32>
    %cst_5 = arith.constant 0.000000e+00 : f32
    %6 = vector.broadcast %cst_5 : f32 to vector<8x128xf32>
    %7 = arith.maximumf %5, %6 : vector<8x128xf32>
    %c0_6 = arith.constant 0 : index
    %c0_7 = arith.constant 0 : index
    %8 = vector.load %arg4[%c0_6, %c0_7] : memref<128x8xf32, #tpu.memory_space<vmem>>, vector<128x8xf32>
    %cst_8 = arith.constant dense<0.000000e+00> : vector<8x8xf32>
    %9 = tpu.matmul %7, %8, %cst_8 {dimension_numbers = #tpu.dot_dimension_numbers<[1], [0], [0], [1], [0, 0, 1, 1], [], []>} : vector<8x128xf32>, vector<128x8xf32>, vector<8x8xf32> -> vector<8x8xf32>
    %c0_9 = arith.constant 0 : index
    %c0_10 = arith.constant 0 : index
    %10 = vector.load %arg5[%c0_9, %c0_10] : memref<1x8xf32, #tpu.memory_space<vmem>>, vector<1x8xf32>
    %11 = vector.broadcast %10 : vector<1x8xf32> to vector<8x8xf32>
    %12 = arith.addf %9, %11 : vector<8x8xf32>
    %c0_11 = arith.constant 0 : index
    %c0_12 = arith.constant 0 : index
    %13 = vector.load %arg6[%c0_11, %c0_12] : memref<8x8xf32, #tpu.memory_space<vmem>>, vector<8x8xf32>
    tpu.vector_store %arg6[%c0_11, %c0_12], %12 {strides = array<i32>} : memref<8x8xf32, #tpu.memory_space<vmem>>, vector<8x8xf32>,
    return
  }
  func.func @transform_0(%arg0: i32) -> (i32, i32) {
    %c0_i32 = arith.constant 0 : i32
    %c0_i32_0 = arith.constant 0 : i32
    return %arg0, %c0_i32 : i32, i32
  }
  func.func @transform_1(%arg0: i32) -> (i32, i32) {
    %c0_i32 = arith.constant 0 : i32
    %c0_i32_0 = arith.constant 0 : i32
    %c0_i32_1 = arith.constant 0 : i32
    return %c0_i32, %c0_i32_0 : i32, i32
  }
  func.func @transform_2(%arg0: i32) -> (i32, i32) {
    %c0_i32 = arith.constant 0 : i32
    %c0_i32_0 = arith.constant 0 : i32
    %c0_i32_1 = arith.constant 0 : i32
    return %c0_i32, %c0_i32_0 : i32, i32
  }
  func.func @transform_3(%arg0: i32) -> (i32, i32) {
    %c0_i32 = arith.constant 0 : i32
    %c0_i32_0 = arith.constant 0 : i32
    %c0_i32_1 = arith.constant 0 : i32
    return %c0_i32, %c0_i32_0 : i32, i32
  }
  func.func @transform_4(%arg0: i32) -> (i32, i32) {
    %c0_i32 = arith.constant 0 : i32
    %c0_i32_0 = arith.constant 0 : i32
    %c0_i32_1 = arith.constant 0 : i32
    return %c0_i32, %c0_i32_0 : i32, i32
  }
  func.func @transform_5(%arg0: i32) -> (i32, i32) {
    %c0_i32 = arith.constant 0 : i32
    %c0_i32_0 = arith.constant 0 : i32
    return %arg0, %c0_i32 : i32, i32
  }
}

</mosaic_0001>

<llo_original>
// kernel: qnet_forward.1
$region0: #{qnet_forward.1}
  #allocation0 [shape = 'u32[]', space=smem, size = 0x4, offset = 0x4, fixed_abs, tag = 'smem constant byte address 0x4 - core index']
  #allocation1 [shape = 'u32[144,128]{1,0:T(1,128)}', space=vmem, size = 0x12000, scoped, tag = 'internal scratch']
  %s0 = inlined_call_operand.vmem [shape: f32[8,4], index: 0, kind: input, shape index: {}]
  %s1 = inlined_call_operand.vmem [shape: f32[4,128], index: 1, kind: input, shape index: {}]
  %s2 = inlined_call_operand.vmem [shape: f32[1,128], index: 2, kind: input, shape index: {}]
  %s3 = inlined_call_operand.vmem [shape: f32[128,8], index: 3, kind: input, shape index: {}]
  %s4 = inlined_call_operand.vmem [shape: f32[1,8], index: 4, kind: input, shape index: {}]
  %s5 = inlined_call_operand.vmem [shape: f32[8,8], index: 5, kind: output, shape index: {}]
  %s6 = sld [smem:[#allocation0]]
  $region30: #{qnet_forward.1} parent=0
    _
  %s8 = ssub.s32 1, %s6
  %s9 = scalar_select 0, %s8, %s6
  // Predicated region
  $region2: #{qnet_forward.1} parent=0 // pred_check
    _
  $region3: #{qnet_forward.1} parent=0 // pred_check_branch
    %11 = sbr.rel (0) target = $region5
  $region4: #{qnet_forward.1} parent=0 // pred_region
    _
  $region5: #{qnet_forward.1} parent=0 // pred_fallthru
    _
  // Predicated region
  $region6: #{qnet_forward.1} parent=0 // pred_check
    _
  $region7: #{qnet_forward.1} parent=0 // pred_check_branch
    %13 = sbr.rel (0) target = $region9
  $region8: #{qnet_forward.1} parent=0 // pred_region
    _
  $region9: #{qnet_forward.1} parent=0 // pred_fallthru
    _
  // Predicated region
  $region10: #{qnet_forward.1} parent=0 // pred_check
    _
  $region11: #{qnet_forward.1} parent=0 // pred_check_branch
    %15 = sbr.rel (0) target = $region13
  $region12: #{qnet_forward.1} parent=0 // pred_region
    _
  $region13: #{qnet_forward.1} parent=0 // pred_fallthru
    _
  // Predicated region
  $region14: #{qnet_forward.1} parent=0 // pred_check
    _
  $region15: #{qnet_forward.1} parent=0 // pred_check_branch
    %17 = sbr.rel (0) target = $region17
  $region16: #{qnet_forward.1} parent=0 // pred_region
    _
  $region17: #{qnet_forward.1} parent=0 // pred_fallthru
    _
  // Predicated region
  $region18: #{qnet_forward.1} parent=0 // pred_check
    _
  $region19: #{qnet_forward.1} parent=0 // pred_check_branch
    %19 = sbr.rel (0) target = $region21
  $region20: #{qnet_forward.1} parent=0 // pred_region
    _
  $region21: #{qnet_forward.1} parent=0 // pred_fallthru
    _
  %v20 = vld [vmem:[%s0] sm:$0xff]
  %v21 = vld [vmem:[%s1] sm:$0xf]
  %v22 = vld [vmem:[%s2] sm:$0x1]
  %v24 = vlaneseq
  %v25 = vshrl.u32 %v24, 7
  %v26 = vsub.s32 0, %v25
  %v27 = vrot.slane %v22, %v26
  %vm29 = vcmask 31744
  %v31 = vsel %vm29, %v20, 0
  %vm33 = vcmask 1043456
  %v35 = vsel %vm33, %v21, 0
  %37 = vmatprep.subr.mxu0 0.0
  %38 = vmatpush1.msra.mxu0 0.0
  %39 = vmatprep.subr.mxu0 0.0
  %40 = vmatpush1.msra.mxu0 0.0
  %41 = vmatprep.subr.mxu0 0.0
  %42 = vmatpush1.msra.mxu0 0.0
  %43 = vmatprep.subr.mxu0 0.0
  %44 = vmatpush1.msra.mxu0 0.0
  %45 = vmatprep.subr.mxu0 0.0
  %46 = vmatpush1.msra.mxu0 0.0
  %47 = vmatprep.subr.mxu0 0.0
  %48 = vmatpush1.msra.mxu0 0.0
  %49 = vmatprep.subr.mxu0 0.0
  %50 = vmatpush1.msra.mxu0 0.0
  %51 = vmatprep.subr.mxu0 0.0
  %52 = vmatpush1.msra.mxu0 0.0
  %53 = vmatprep.subr.mxu0 0.0
  %54 = vmatpush1.msra.mxu0 0.0
  %55 = vmatprep.subr.mxu0 0.0
  %56 = vmatpush1.msra.mxu0 0.0
  %57 = vmatprep.subr.mxu0 0.0
  %58 = vmatpush1.msra.mxu0 0.0
  %59 = vmatprep.subr.mxu0 0.0
  %60 = vmatpush1.msra.mxu0 0.0
  %61 = vmatprep.subr.mxu0 0.0
  %62 = vmatpush1.msra.mxu0 0.0
  %63 = vmatprep.subr.mxu0 0.0
  %64 = vmatpush1.msra.mxu0 0.0
  %65 = vmatprep.subr.mxu0 0.0
  %66 = vmatpush1.msra.mxu0 0.0
  %67 = vmatprep.subr.mxu0 0.0
  %68 = vmatpush1.msra.mxu0 %v35
  %69 = vmatprep.subr.mxu0 0.0
  %70 = vmatpush2.msra.mxu0 0.0
  %71 = vmatprep.subr.mxu0 0.0
  %72 = vmatpush2.msra.mxu0 0.0
  %73 = vmatprep.subr.mxu0 0.0
  %74 = vmatpush2.msra.mxu0 0.0
  %75 = vmatprep.subr.mxu0 0.0
  %76 = vmatpush2.msra.mxu0 0.0
  %77 = vmatprep.subr.mxu0 0.0
  %78 = vmatpush2.msra.mxu0 0.0
  %79 = vmatprep.subr.mxu0 0.0
  %80 = vmatpush2.msra.mxu0 0.0
  %81 = vmatprep.subr.mxu0 0.0
  %82 = vmatpush2.msra.mxu0 0.0
  %83 = vmatprep.subr.mxu0 0.0
  %84 = vmatpush2.msra.mxu0 0.0
  %85 = vmatprep.subr.mxu0 0.0
  %86 = vmatpush2.msra.mxu0 0.0
  %87 = vmatprep.subr.mxu0 0.0
  %88 = vmatpush2.msra.mxu0 0.0
  %89 = vmatprep.subr.mxu0 0.0
  %90 = vmatpush2.msra.mxu0 0.0
  %91 = vmatprep.subr.mxu0 0.0
  %92 = vmatpush2.msra.mxu0 0.0
  %93 = vmatprep.subr.mxu0 0.0
  %94 = vmatpush2.msra.mxu0 0.0
  %95 = vmatprep.subr.mxu0 0.0
  %96 = vmatpush2.msra.mxu0 0.0
  %97 = vmatprep.subr.mxu0 0.0
  %98 = vmatpush2.msra.mxu0 0.0
  %99 = vmatprep.subr.mxu0 0.0
  %100 = vmatpush2.msra.mxu0 0.0
  %101 = vmatprep.mubr.f32.mxu0 0.0
  %102 = vmatmul.mubr.f32.gmra.mxu0 %v31
  %v103 = vpop.f32.mrf.mxu0
  %v104 = vadd.f32 %v27, %v103
  %v105 = vpop.f32.mrf.mxu0
  %106 = vdwg.mxu0
  %v107 = vmax.f32 %v104, 0.0
  %v108 = vld [vmem:[%s3] sm:$0xff]
  %v109 = vld [vmem:[%s3 + $0x8] sm:$0xff]
  %v110 = vld [vmem:[%s3 + $0x10] sm:$0xff]
  %v111 = vld [vmem:[%s3 + $0x18] sm:$0xff]
  %v112 = vld [vmem:[%s3 + $0x20] sm:$0xff]
  %v113 = vld [vmem:[%s3 + $0x28] sm:$0xff]
  %v114 = vld [vmem:[%s3 + $0x30] sm:$0xff]
  %v115 = vld [vmem:[%s3 + $0x38] sm:$0xff]
  %v116 = vld [vmem:[%s3 + $0x40] sm:$0xff]
  %v117 = vld [vmem:[%s3 + $0x48] sm:$0xff]
  %v118 = vld [vmem:[%s3 + $0x50] sm:$0xff]
  %v119 = vld [vmem:[%s3 + $0x58] sm:$0xff]
  %v120 = vld [vmem:[%s3 + $0x60] sm:$0xff]
  %v121 = vld [vmem:[%s3 + $0x68] sm:$0xff]
  %v122 = vld [vmem:[%s3 + $0x70] sm:$0xff]
  %v123 = vld [vmem:[%s3 + $0x78] sm:$0xff]
  %v124 = vld [vmem:[%s4] sm:$0x1]
  %v126 = vlaneseq
  %v127 = vshrl.u32 %v126, 7
  %v128 = vsub.s32 0, %v127
  %v129 = vrot.slane %v124, %v128
  %131 = vmatprep.subr.mxu0 0.0
  %132 = vmatpush1.msra.mxu0 %v123
  %133 = vmatprep.subr.mxu0 0.0
  %134 = vmatpush1.msra.mxu0 %v122
  %135 = vmatprep.subr.mxu0 0.0
  %136 = vmatpush1.msra.mxu0 %v121
  %137 = vmatprep.subr.mxu0 0.0
  %138 = vmatpush1.msra.mxu0 %v120
  %139 = vmatprep.subr.mxu0 0.0
  %140 = vmatpush1.msra.mxu0 %v119
  %141 = vmatprep.subr.mxu0 0.0
  %142 = vmatpush1.msra.mxu0 %v118
  %143 = vmatprep.subr.mxu0 0.0
  %144 = vmatpush1.msra.mxu0 %v117
  %145 = vmatprep.subr.mxu0 0.0
  %146 = vmatpush1.msra.mxu0 %v116
  %147 = vmatprep.subr.mxu0 0.0
  %148 = vmatpush1.msra.mxu0 %v115
  %149 = vmatprep.subr.mxu0 0.0
  %150 = vmatpush1.msra.mxu0 %v114
  %151 = vmatprep.subr.mxu0 0.0
  %152 = vmatpush1.msra.mxu0 %v113
  %153 = vmatprep.subr.mxu0 0.0
  %154 = vmatpush1.msra.mxu0 %v112
  %155 = vmatprep.subr.mxu0 0.0
  %156 = vmatpush1.msra.mxu0 %v111
  %157 = vmatprep.subr.mxu0 0.0
  %158 = vmatpush1.msra.mxu0 %v110
  %159 = vmatprep.subr.mxu0 0.0
  %160 = vmatpush1.msra.mxu0 %v109
  %161 = vmatprep.subr.mxu0 0.0
  %162 = vmatpush1.msra.mxu0 %v108
  %163 = vmatprep.subr.mxu0 0.0
  %164 = vmatpush2.msra.mxu0 0.0
  %165 = vmatprep.subr.mxu0 0.0
  %166 = vmatpush2.msra.mxu0 0.0
  %167 = vmatprep.subr.mxu0 0.0
  %168 = vmatpush2.msra.mxu0 0.0
  %169 = vmatprep.subr.mxu0 0.0
  %170 = vmatpush2.msra.mxu0 0.0
  %171 = vmatprep.subr.mxu0 0.0
  %172 = vmatpush2.msra.mxu0 0.0
  %173 = vmatprep.subr.mxu0 0.0
  %174 = vmatpush2.msra.mxu0 0.0
  %175 = vmatprep.subr.mxu0 0.0
  %176 = vmatpush2.msra.mxu0 0.0
  %177 = vmatprep.subr.mxu0 0.0
  %178 = vmatpush2.msra.mxu0 0.0
  %179 = vmatprep.subr.mxu0 0.0
  %180 = vmatpush2.msra.mxu0 0.0
  %181 = vmatprep.subr.mxu0 0.0
  %182 = vmatpush2.msra.mxu0 0.0
  %183 = vmatprep.subr.mxu0 0.0
  %184 = vmatpush2.msra.mxu0 0.0
  %185 = vmatprep.subr.mxu0 0.0
  %186 = vmatpush2.msra.mxu0 0.0
  %187 = vmatprep.subr.mxu0 0.0
  %188 = vmatpush2.msra.mxu0 0.0
  %189 = vmatprep.subr.mxu0 0.0
  %190 = vmatpush2.msra.mxu0 0.0
  %191 = vmatprep.subr.mxu0 0.0
  %192 = vmatpush2.msra.mxu0 0.0
  %193 = vmatprep.subr.mxu0 0.0
  %194 = vmatpush2.msra.mxu0 0.0
  %195 = vmatprep.mubr.f32.mxu0 0.0
  %196 = vmatmul.mubr.f32.gmra.mxu0 %v107
  %v197 = vpop.f32.mrf.mxu0
  %v198 = vadd.f32 %v129, %v197
  %v199 = vpop.f32.mrf.mxu0
  %200 = vdwg.mxu0
  %vm201 = vcmask 64512
  %202 = vst.msk [vmem:[%s5] sm:$0xff] %vm201, %v198
  // Predicated region
  $region22: #{qnet_forward.1} parent=0 // pred_check
    _
  $region23: #{qnet_forward.1} parent=0 // pred_check_branch
    %204 = sbr.rel (0) target = $region25
  $region24: #{qnet_forward.1} parent=0 // pred_region
    _
  $region25: #{qnet_forward.1} parent=0 // pred_fallthru
    _
  // Predicated region
  $region26: #{qnet_forward.1} parent=0 // pred_check
    _
  $region27: #{qnet_forward.1} parent=0 // pred_check_branch
    %206 = sbr.rel (0) target = $region29
  $region28: #{qnet_forward.1} parent=0 // pred_region
    _
  $region29: #{qnet_forward.1} parent=0 // pred_fallthru
    _

</llo_original>
